<compile_context>
chip_gen: v6e
topology: v6e:2x2x1
jax: 0.10.0
libtpu: 0.0.40
codegen_flags: <defaults>
</compile_context>

<pallas_src>
import functools
import math

import jax
import jax.numpy as jnp
from jax.experimental import pallas as pl
from jax.experimental.pallas import tpu as pltpu


def _round_up(v, m):
    return (v + m - 1) // m * m


def _mean_pool_kernel(x_ref, w_ref, b_ref, o_ref, *, t_total, t_tile, n_tile):
    # x_ref: (n_tile, c_in, t_tile)   time on lanes, stored dtype
    # w_ref: (c_out, c_in)            single resident copy, x's dtype
    # b_ref: (c_out, 1) f32
    # o_ref: (n_tile, c_out, 1) f32   output block doubles as the accumulator
    kt = pl.program_id(1)
    last = pl.num_programs(1) - 1

    @pl.when(kt == 0)
    def _():
        o_ref[...] = jnp.zeros_like(o_ref)

    w = w_ref[...]
    bvec = b_ref[...]

    def row_update(bb, tail_mask):
        # (c_out, c_in) @ (c_in, t_tile): canonical MXU orientation, f32 acc.
        # bf16 inputs use the native bf16 MXU; f32 inputs keep f32 precision.
        y = jnp.dot(w, x_ref[bb], preferred_element_type=jnp.float32)
        y = jnp.maximum(y + bvec, 0.0)                  # bias + ReLU
        if tail_mask is not None:
            y = jnp.where(tail_mask, y, 0.0)            # ragged-T tail only
        # Lane reduce over time; keepdims keeps the natural (c_out, 1) column
        # layout so no cross-lane relayout is needed before accumulating.
        o_ref[bb] += jnp.sum(y, axis=1, keepdims=True)

    ragged = (t_total % t_tile) != 0
    if ragged:
        # Hot path: every tile except the last is summed unmasked.
        @pl.when(kt != last)
        def _():
            for bb in range(n_tile):
                row_update(bb, None)

        # Only the ragged last tile pays for iota + compare + select.
        @pl.when(kt == last)
        def _():
            ti = jax.lax.broadcasted_iota(jnp.int32, (1, t_tile), 1)
            mask = (kt * t_tile + ti) < t_total
            for bb in range(n_tile):
                row_update(bb, mask)
    else:
        for bb in range(n_tile):
            row_update(bb, None)

    @pl.when(kt == last)
    def _():
        o_ref[...] = o_ref[...] * (1.0 / t_total)


def mean_pooling_forward(x_nchw, weight, bias):
    """x_nchw: (N, C_in, T, 1). weight: (C_out, C_in). bias: (C_out,)."""
    n, c_in, t, w_dim = x_nchw.shape
    assert w_dim == 1
    c_out = weight.shape[0]

    # Squeeze the width-1 dim; keep x in its STORED dtype (no wrapper upcast:
    # the kernel is HBM-read bound on x and an unfused cast would add a full
    # extra HBM read+write pass).
    x = x_nchw[:, :, :, 0]
    # Matmul operand dtype follows x: bf16 activations -> bf16 weights ->
    # native bf16 MXU path on v7x; f32 activations keep f32 precision.
    w = weight.astype(x.dtype)
    b = bias.reshape(c_out, 1).astype(jnp.float32)

    # --- Batch tiling: guarantee >=2 steps on the "parallel" grid axis so
    # both v7x TensorCores get work even at small batch (no effect on v5e/v6e).
    n_tile = min(8, -(-n // 2)) if n >= 2 else 1
    num_n = pl.cdiv(n, n_tile)

    # --- Time tiling: size the x window from the chip's actual VMEM.
    mib = 1024 * 1024
    try:
        vmem_cap = pltpu.get_tpu_info().vmem_capacity_bytes
    except Exception:
        vmem_cap = 64 * mib
    vmem_limit = 64 * mib if vmem_cap >= 128 * mib else 32 * mib

    x_item = x.dtype.itemsize
    w_item = w.dtype.itemsize
    sub_x = 8 if x_item >= 4 else (32 // x_item)        # sublane packing of x
    sub_w = 8 if w_item >= 4 else (32 // w_item)
    c_in_pad = _round_up(c_in, sub_x)
    c_out_pad8 = _round_up(c_out, 8)

    # Resident (t_tile-independent) footprint: double-buffered weight & bias
    # blocks plus the lane-padded output/accumulator block.
    fixed = 2 * _round_up(c_out, sub_w) * _round_up(c_in, 128) * w_item
    fixed += 2 * c_out_pad8 * 128 * 4                   # bias block
    fixed += 2 * n_tile * c_out_pad8 * 128 * 4          # output/accumulator block
    budget = (vmem_limit * 4) // 5 - fixed
    # Per time-lane: double-buffered x window + one live f32 y row.
    per_lane = 2 * n_tile * c_in_pad * x_item + c_out_pad8 * 4
    max_lanes = max(budget // per_lane, 128)
    t_tile = t if t <= max_lanes else max((max_lanes // 128) * 128, 128)
    num_t = pl.cdiv(t, t_tile)
    # TODO(synk): on v5e, if per-step DMA issue gaps show up in traces, set
    # pipeline_mode=pl.Buffered(3) on the x BlockSpec.

    kernel = functools.partial(
        _mean_pool_kernel, t_total=t, t_tile=t_tile, n_tile=n_tile
    )

    out = pl.pallas_call(
        kernel,
        out_shape=jax.ShapeDtypeStruct((n, c_out, 1), jnp.float32),
        grid_spec=pltpu.PrefetchScalarGridSpec(
            num_scalar_prefetch=0,
            grid=(num_n, num_t),
            in_specs=[
                pl.BlockSpec((n_tile, c_in, t_tile), lambda i, kt: (i, 0, kt)),
                pl.BlockSpec((c_out, c_in), lambda i, kt: (0, 0)),
                pl.BlockSpec((c_out, 1), lambda i, kt: (0, 0)),
            ],
            out_specs=pl.BlockSpec((n_tile, c_out, 1), lambda i, kt: (i, 0, 0)),
        ),
        compiler_params=pltpu.CompilerParams(
            # Batch axis parallel (2-TC sharding on v7x); the T reduction axis
            # must be "arbitrary" and last for the accumulator pattern.
            dimension_semantics=("parallel", "arbitrary"),
            vmem_limit_bytes=vmem_limit,
        ),
    )(x, w, b)
    return out[:, :, 0]


def init_conv1x1_params(key, n_in, n_out):
    # Matches init_layer: n = n_in * 1 * 1, std = sqrt(2/n), scale = std*sqrt(3),
    # weight ~ U(-scale, scale), bias = 0.
    n = n_in * 1 * 1
    std = math.sqrt(2.0 / n)
    scale = std * math.sqrt(3.0)
    weight = jax.random.uniform(
        key, (n_out, n_in), dtype=jnp.float32, minval=-scale, maxval=scale
    )
    bias = jnp.zeros((n_out,), dtype=jnp.float32)
    return weight, bias


if __name__ == "__main__":
    key = jax.random.PRNGKey(0)
    k_x, k_w = jax.random.split(key)

    N, n_in, T = 2, 4, 16
    n_out = 8

    x = jax.random.normal(k_x, (N, n_in, T, 1), dtype=jnp.float32)
    weight, bias = init_conv1x1_params(k_w, n_in, n_out)

    out = mean_pooling_forward(x, weight, bias)
    out = jax.block_until_ready(out)

    # Reference check in plain JAX (same math, no Pallas).
    ref = jnp.mean(
        jnp.maximum(
            jnp.einsum("nct,oc->not", x[:, :, :, 0], weight) + bias[None, :, None],
            0.0,
        ),
        axis=2,
    )
    assert out.shape == (N, n_out)
    assert jnp.allclose(out, ref, atol=1e-5, rtol=1e-5)

    print("KERNEL_OK")
</pallas_src>

<mosaic_0001>
module attributes {stable_mosaic.version = 11 : i64} {
  func.func @_mean_pool_kernel(%arg0: i32, %arg1: i32, %arg2: memref<1x4x16xf32, #tpu.memory_space<vmem>>, %arg3: memref<8x4xf32, #tpu.memory_space<vmem>>, %arg4: memref<8x1xf32, #tpu.memory_space<vmem>>, %arg5: memref<1x8x1xf32, #tpu.memory_space<vmem>>) attributes {dimension_semantics = [#tpu.dimension_semantics<parallel>, #tpu.dimension_semantics<arbitrary>], iteration_bounds = array<i64: 2, 1>, scalar_prefetch = 0 : i64, scratch_operands = 0 : i64, tpu.core_type = #tpu.core_type<tc>, window_params = [{transform_indices = @transform_0, window_bounds = array<i64: 1, 4, 16>}, {pipeline_mode = #tpu.pipeline_mode<synchronous>, transform_indices = @transform_1, window_bounds = array<i64: 8, 4>}, {pipeline_mode = #tpu.pipeline_mode<synchronous>, transform_indices = @transform_2, window_bounds = array<i64: 8, 1>}, {transform_indices = @transform_3, window_bounds = array<i64: 1, 8, 1>}]} {
    %c0_i32 = arith.constant 0 : i32
    %0 = arith.cmpi eq, %arg1, %c0_i32 : i32
    %1 = arith.extui %0 : i1 to i32
    %c0_i32_0 = arith.constant 0 : i32
    %2 = arith.cmpi ne, %1, %c0_i32_0 : i32
    scf.if %2 {
      %cst_17 = arith.constant 0.000000e+00 : f32
      %23 = vector.broadcast %cst_17 : f32 to vector<1x8x1xf32>
      %c0_18 = arith.constant 0 : index
      %c0_19 = arith.constant 0 : index
      %c0_20 = arith.constant 0 : index
      %24 = vector.load %arg5[%c0_18, %c0_19, %c0_20] : memref<1x8x1xf32, #tpu.memory_space<vmem>>, vector<1x8x1xf32>
      tpu.vector_store %arg5[%c0_18, %c0_19, %c0_20], %23 {strides = array<i32>} : memref<1x8x1xf32, #tpu.memory_space<vmem>>, vector<1x8x1xf32>,
    } else {
    }
    %c0 = arith.constant 0 : index
    %c0_1 = arith.constant 0 : index
    %3 = vector.load %arg3[%c0, %c0_1] : memref<8x4xf32, #tpu.memory_space<vmem>>, vector<8x4xf32>
    %c0_2 = arith.constant 0 : index
    %c0_3 = arith.constant 0 : index
    %4 = vector.load %arg4[%c0_2, %c0_3] : memref<8x1xf32, #tpu.memory_space<vmem>>, vector<8x1xf32>
    %c0_4 = arith.constant 0 : index
    %c0_5 = arith.constant 0 : index
    %c0_6 = arith.constant 0 : index
    %5 = vector.load %arg2[%c0_4, %c0_5, %c0_6] : memref<1x4x16xf32, #tpu.memory_space<vmem>>, vector<1x4x16xf32>
    %6 = vector.shape_cast %5 : vector<1x4x16xf32> to vector<4x16xf32>
    %cst = arith.constant dense<0.000000e+00> : vector<8x16xf32>
    %7 = tpu.matmul %3, %6, %cst {dimension_numbers = #tpu.dot_dimension_numbers<[1], [0], [0], [1], [0, 0, 1, 1], [], []>} : vector<8x4xf32>, vector<4x16xf32>, vector<8x16xf32> -> vector<8x16xf32>
    %8 = vector.broadcast %4 : vector<8x1xf32> to vector<8x16xf32>
    %9 = arith.addf %7, %8 : vector<8x16xf32>
    %cst_7 = arith.constant 0.000000e+00 : f32
    %10 = vector.broadcast %cst_7 : f32 to vector<8x16xf32>
    %11 = arith.maximumf %9, %10 : vector<8x16xf32>
    %c0_8 = arith.constant 0 : index
    %c0_9 = arith.constant 0 : index
    %c0_10 = arith.constant 0 : index
    %12 = vector.load %arg5[%c0_8, %c0_9, %c0_10] : memref<1x8x1xf32, #tpu.memory_space<vmem>>, vector<1x8x1xf32>
    %13 = vector.shape_cast %12 : vector<1x8x1xf32> to vector<8x1xf32>
    %cst_11 = arith.constant dense<0.000000e+00> : vector<8xf32>
    %14 = vector.multi_reduction <add>, %11, %cst_11 [1] : vector<8x16xf32> to vector<8xf32>
    %15 = vector.shape_cast %14 : vector<8xf32> to vector<8x1xf32>
    %16 = arith.addf %13, %15 : vector<8x1xf32>
    %c0_12 = arith.constant 0 : index
    %c0_13 = arith.constant 0 : index
    %c0_14 = arith.constant 0 : index
    %17 = vector.load %arg5[%c0_12, %c0_13, %c0_14] : memref<1x8x1xf32, #tpu.memory_space<vmem>>, vector<1x8x1xf32>
    %18 = vector.shape_cast %17 : vector<1x8x1xf32> to vector<8x1xf32>
    %19 = vector.shape_cast %16 : vector<8x1xf32> to vector<1x8x1xf32>
    tpu.vector_store %arg5[%c0_12, %c0_13, %c0_14], %19 {strides = array<i32>} : memref<1x8x1xf32, #tpu.memory_space<vmem>>, vector<1x8x1xf32>,
    %c0_i32_15 = arith.constant 0 : i32
    %20 = arith.cmpi eq, %arg1, %c0_i32_15 : i32
    %21 = arith.extui %20 : i1 to i32
    %c0_i32_16 = arith.constant 0 : i32
    %22 = arith.cmpi ne, %21, %c0_i32_16 : i32
    scf.if %22 {
      %c0_17 = arith.constant 0 : index
      %c0_18 = arith.constant 0 : index
      %c0_19 = arith.constant 0 : index
      %23 = vector.load %arg5[%c0_17, %c0_18, %c0_19] : memref<1x8x1xf32, #tpu.memory_space<vmem>>, vector<1x8x1xf32>
      %cst_20 = arith.constant 6.250000e-02 : f32
      %24 = vector.broadcast %cst_20 : f32 to vector<1x8x1xf32>
      %25 = arith.mulf %23, %24 : vector<1x8x1xf32>
      %c0_21 = arith.constant 0 : index
      %c0_22 = arith.constant 0 : index
      %c0_23 = arith.constant 0 : index
      %26 = vector.load %arg5[%c0_21, %c0_22, %c0_23] : memref<1x8x1xf32, #tpu.memory_space<vmem>>, vector<1x8x1xf32>
      tpu.vector_store %arg5[%c0_21, %c0_22, %c0_23], %25 {strides = array<i32>} : memref<1x8x1xf32, #tpu.memory_space<vmem>>, vector<1x8x1xf32>,
    } else {
    }
    return
  }
  func.func @transform_0(%arg0: i32, %arg1: i32) -> (i32, i32, i32) {
    %c0_i32 = arith.constant 0 : i32
    %c0_i32_0 = arith.constant 0 : i32
    return %arg0, %c0_i32, %arg1 : i32, i32, i32
  }
  func.func @transform_1(%arg0: i32, %arg1: i32) -> (i32, i32) {
    %c0_i32 = arith.constant 0 : i32
    %c0_i32_0 = arith.constant 0 : i32
    %c0_i32_1 = arith.constant 0 : i32
    return %c0_i32, %c0_i32_0 : i32, i32
  }
  func.func @transform_2(%arg0: i32, %arg1: i32) -> (i32, i32) {
    %c0_i32 = arith.constant 0 : i32
    %c0_i32_0 = arith.constant 0 : i32
    %c0_i32_1 = arith.constant 0 : i32
    return %c0_i32, %c0_i32_0 : i32, i32
  }
  func.func @transform_3(%arg0: i32, %arg1: i32) -> (i32, i32, i32) {
    %c0_i32 = arith.constant 0 : i32
    %c0_i32_0 = arith.constant 0 : i32
    %c0_i32_1 = arith.constant 0 : i32
    return %arg0, %c0_i32, %c0_i32_0 : i32, i32, i32
  }
}

</mosaic_0001>

<llo_original>
// kernel: tpu_custom_call.1
$region0: #{tpu_custom_call.1}
  #allocation0 [shape = 'u32[]', space=smem, size = 0x4, offset = 0x4, fixed_abs, tag = 'smem constant byte address 0x4 - core index']
  #allocation1 [shape = 'u32[144,128]{1,0:T(1,128)}', space=vmem, size = 0x12000, scoped, tag = 'internal scratch']
  %s0 = inlined_call_operand.vmem [shape: f32[2,4,16], index: 0, kind: input, shape index: {}]
  %s1 = inlined_call_operand.vmem [shape: f32[8,4], index: 1, kind: input, shape index: {}]
  %s2 = inlined_call_operand.vmem [shape: f32[8,1], index: 2, kind: input, shape index: {}]
  %s3 = inlined_call_operand.vmem [shape: f32[2,8,1], index: 3, kind: output, shape index: {}]
  %s4 = sld [smem:[#allocation0]]
  $region53: #{tpu_custom_call.1} parent=0
    _
  %s6 = ssub.s32 1, %s4
  %s7 = scalar_select 0, %s6, %s4
  loop: start=0, step=1, limit=4
  $region2: #{tpu_custom_call.1} parent=0 // loop_pre_header
    _
  $region3: #{tpu_custom_call.1} parent=0 // loop_header
    %s9 = sphi 0, %s13
    %p10 = scmp.ge.s32.totalorder %s9, 4
    %s16 = sphi 0, %s28
    %s17 = sphi 0, %s24
    %s18 = sphi 0, %s16
    %s19 = sphi 0, %s17
    %s20 = sphi 0, %s18
    %s21 = sphi 0, %s19
    %s33 = sphi 0, %s35
    %s36 = sphi 0, %s33
    %s37 = sphi 0, %s36
    %s53 = sphi 0, %s37
    %s57 = sphi 0, %s57
    %s59 = sphi 0, %s57
    %s60 = sphi 0, %s59
    %s74 = sphi 0, %s60
    %s78 = sphi 0, %s78
    %s80 = sphi 0, %s78
    %s81 = sphi 0, %s80
    %s95 = sphi 0, %s81
    %s101 = sphi 0, %s103
    %s104 = sphi 0, %s101
    %s105 = sphi 0, %s104
    %s121 = sphi 0, %s105
  $region4: #{tpu_custom_call.1} parent=0 // loop_header_branch
    %12 = sbr.rel (%p10) target = $region8
  $region5: #{tpu_custom_call.1} parent=0 // loop_body
    %s14 = ssub.s32 %s9, 1
    %s15 = ssub.s32 %s9, 2
    %s22 = sadd.s32 1, %s17
    %p23 = scmp.ge.s32.totalorder %s22, 1
    %s24 = scalar_select %p23, 0, %s22
    %s25 = sadd.s32 1, %s16
    %s26 = scalar_select %p23, %s25, %s16
    %p27 = scmp.ge.s32.totalorder %s26, 2
    %s28 = scalar_select %p27, 0, %s26
    %s29 = ssub.s32 %s16, %s28
    %s30 = ssub.s32 %s17, %s24
    %s31 = sor.u32 %s29, %s30
    %p32 = scmp.eq.s32.totalorder %s31, 0
    %s34 = sadd.s32 %s33, 1
    %s35 = scalar_select %p32, %s33, %s34
    %p38 = pneg %p32
    %p39 = scmp.eq.s32.totalorder %s9, 1
    %p40 = por %p38, %p39
    %p41 = scmp.ne.s32.totalorder %s33, %s36
    %p42 = scmp.eq.s32.totalorder %s9, 0
    %p43 = por %p41, %p42
    %p44 = scmp.ne.s32.totalorder %s33, %s36
    %p45 = scmp.eq.s32.totalorder %s14, 1
    %p46 = por %p44, %p45
    %p47 = scmp.ne.s32.totalorder %s36, %s37
    %p48 = scmp.eq.s32.totalorder %s14, 0
    %p49 = por %p47, %p48
    %p50 = scmp.ne.s32.totalorder %s36, %s37
    %p51 = scmp.eq.s32.totalorder %s15, 1
    %p52 = por %p50, %p51
    %p54 = scmp.ne.s32.totalorder %s37, %s53
    %p55 = scmp.eq.s32.totalorder %s15, 0
    %p56 = por %p54, %p55
    %s58 = sadd.s32 %s57, 1
    %p61 = scmp.eq.s32.totalorder %s9, 1
    %p62 = scmp.ne.s32.totalorder %s57, %s59
    %p63 = scmp.eq.s32.totalorder %s9, 0
    %p64 = por %p62, %p63
    %p65 = scmp.ne.s32.totalorder %s57, %s59
    %p66 = scmp.eq.s32.totalorder %s14, 1
    %p67 = por %p65, %p66
    %p68 = scmp.ne.s32.totalorder %s59, %s60
    %p69 = scmp.eq.s32.totalorder %s14, 0
    %p70 = por %p68, %p69
    %p71 = scmp.ne.s32.totalorder %s59, %s60
    %p72 = scmp.eq.s32.totalorder %s15, 1
    %p73 = por %p71, %p72
    %p75 = scmp.ne.s32.totalorder %s60, %s74
    %p76 = scmp.eq.s32.totalorder %s15, 0
    %p77 = por %p75, %p76
    %s79 = sadd.s32 %s78, 1
    %p82 = scmp.eq.s32.totalorder %s9, 1
    %p83 = scmp.ne.s32.totalorder %s78, %s80
    %p84 = scmp.eq.s32.totalorder %s9, 0
    %p85 = por %p83, %p84
    %p86 = scmp.ne.s32.totalorder %s78, %s80
    %p87 = scmp.eq.s32.totalorder %s14, 1
    %p88 = por %p86, %p87
    %p89 = scmp.ne.s32.totalorder %s80, %s81
    %p90 = scmp.eq.s32.totalorder %s14, 0
    %p91 = por %p89, %p90
    %p92 = scmp.ne.s32.totalorder %s80, %s81
    %p93 = scmp.eq.s32.totalorder %s15, 1
    %p94 = por %p92, %p93
    %p96 = scmp.ne.s32.totalorder %s81, %s95
    %p97 = scmp.eq.s32.totalorder %s15, 0
    %p98 = por %p96, %p97
    %s99 = ssub.s32 %s16, %s28
    %p100 = scmp.eq.s32.totalorder %s99, 0
    %s102 = sadd.s32 %s101, 1
    %s103 = scalar_select %p100, %s101, %s102
    %p106 = pneg %p100
    %p107 = scmp.eq.s32.totalorder %s9, 1
    %p108 = por %p106, %p107
    %p109 = scmp.ne.s32.totalorder %s101, %s104
    %p110 = scmp.eq.s32.totalorder %s9, 0
    %p111 = por %p109, %p110
    %p112 = scmp.ne.s32.totalorder %s101, %s104
    %p113 = scmp.eq.s32.totalorder %s14, 1
    %p114 = por %p112, %p113
    %p115 = scmp.ne.s32.totalorder %s104, %s105
    %p116 = scmp.eq.s32.totalorder %s14, 0
    %p117 = por %p115, %p116
    %p118 = scmp.ne.s32.totalorder %s104, %s105
    %p119 = scmp.eq.s32.totalorder %s15, 1
    %p120 = por %p118, %p119
    %p122 = scmp.ne.s32.totalorder %s105, %s121
    %p123 = scmp.eq.s32.totalorder %s15, 0
    %p124 = por %p122, %p123
    %p125 = scmp.le.s32.totalorder 1, %s9
    %p126 = scmp.lt.s32.totalorder %s9, 3
    %p127 = pnand %p125, %p126
    %p128 = pneg %p127
    // Predicated region
    $region9: #{tpu_custom_call.1} parent=5 // pred_check
      _
    $region10: #{tpu_custom_call.1} parent=5 // pred_check_branch
      %130 = sbr.rel (%p127) target = $region12
    $region11: #{tpu_custom_call.1} parent=5 // pred_region
      %s131 = ssub.s32 %s9, 1
      // Predicated region
      $region13: #{tpu_custom_call.1} parent=11 // pred_check
        %p132 = pneg %p70
      $region14: #{tpu_custom_call.1} parent=11 // pred_check_branch
        %134 = sbr.rel (%p132) target = $region16
      $region15: #{tpu_custom_call.1} parent=11 // pred_region
        _
      $region16: #{tpu_custom_call.1} parent=11 // pred_fallthru
        _
      // Predicated region
      $region17: #{tpu_custom_call.1} parent=11 // pred_check
        %p135 = pneg %p91
      $region18: #{tpu_custom_call.1} parent=11 // pred_check_branch
        %137 = sbr.rel (%p135) target = $region20
      $region19: #{tpu_custom_call.1} parent=11 // pred_region
        _
      $region20: #{tpu_custom_call.1} parent=11 // pred_fallthru
        _
    $region12: #{tpu_custom_call.1} parent=5 // pred_fallthru
      _
    %p138 = scmp.lt.s32.totalorder %s9, 2
    // Predicated region
    $region21: #{tpu_custom_call.1} parent=5 // pred_check
      %p139 = pneg %p138
    $region22: #{tpu_custom_call.1} parent=5 // pred_check_branch
      %141 = sbr.rel (%p139) target = $region24
    $region23: #{tpu_custom_call.1} parent=5 // pred_region
      // Predicated region
      $region25: #{tpu_custom_call.1} parent=23 // pred_check
        %p142 = pneg %p43
      $region26: #{tpu_custom_call.1} parent=23 // pred_check_branch
        %144 = sbr.rel (%p142) target = $region28
      $region27: #{tpu_custom_call.1} parent=23 // pred_region
        %p145 = scmp.lt.s32.totalorder %s16, 1
        %s146 = scalar_select %p145, %s16, 1
        %p147 = scmp.lt.s32.totalorder %s17, 0
        %s148 = scalar_select %p147, %s17, 0
        %s149 = sadd.s32 %s148, %s146
        %s150 = smul.addr %s149, 4
        %s151 = scalar_lea.vmem %s0, %s150
      $region28: #{tpu_custom_call.1} parent=23 // pred_fallthru
        _
    $region24: #{tpu_custom_call.1} parent=5 // pred_fallthru
      _
    %p152 = scmp.le.s32.totalorder 1, %s9
    %p153 = scmp.lt.s32.totalorder %s9, 3
    %p154 = pnand %p152, %p153
    %p155 = pneg %p154
    // Predicated region
    $region29: #{tpu_custom_call.1} parent=5 // pred_check
      _
    $region30: #{tpu_custom_call.1} parent=5 // pred_check_branch
      %157 = sbr.rel (%p154) target = $region32
    $region31: #{tpu_custom_call.1} parent=5 // pred_region
      %s158 = ssub.s32 %s9, 1
      %p159 = scmp.lt.s32.totalorder %s18, 1
      %s160 = scalar_select %p159, %s18, 1
      %p161 = scmp.lt.s32.totalorder %s19, 0
      %s162 = scalar_select %p161, %s19, 0
      %s163 = sadd.s32 %s162, %s160
      %s164 = smul.addr %s163, 4
      %s165 = scalar_lea.vmem %s0, %s164
      %p166 = pneg %p49
      %p167 = pneg %p46
      %p168 = pneg %p70
      %p169 = pneg %p67
      %p170 = pneg %p91
      %p171 = pneg %p88
      %p172 = pneg %p117
      %p173 = pneg %p114
      %p174 = scmp.lt.s32.totalorder %s18, 1
      %s175 = scalar_select %p174, %s18, 1
      %s176 = smul.addr %s175, 8
      %s177 = scalar_lea.vmem %s3, %s176
      %p178 = scmp.lt.s32.totalorder %s18, 1
      %s179 = scalar_select %p178, %s18, 1
      %p180 = scmp.lt.s32.totalorder %s19, 0
      %s181 = scalar_select %p180, %s19, 0
      %s182 = sadd.s32 %s181, %s179
      %s183 = smul.addr %s182, 4
      %s184 = scalar_lea.vmem %s0, %s183
      %p185 = scmp.lt.s32.totalorder %s18, 1
      %s186 = scalar_select %p185, %s18, 1
      %s187 = smul.addr %s186, 8
      %s188 = scalar_lea.vmem %s3, %s187
      %p189 = scmp.eq.s32.totalorder %s19, 0
      // Predicated region
      $region33: #{tpu_custom_call.1} parent=31 // pred_check
        %p190 = pneg %p189
      $region34: #{tpu_custom_call.1} parent=31 // pred_check_branch
        %192 = sbr.rel (%p190) target = $region36
      $region35: #{tpu_custom_call.1} parent=31 // pred_region
        %vm193 = vcmask 7168
        %194 = vst.msk [vmem:[%s188] sm:$0xff] %vm193, 0.0
      $region36: #{tpu_custom_call.1} parent=31 // pred_fallthru
        _
      %v195 = vld [vmem:[%s1] sm:$0xff]
      %v196 = vld [vmem:[%s2] sm:$0xff]
      %v197 = vld [vmem:[%s184] sm:$0xf]
      %199 = vset.pattern.permute.xlu0 0
      %200 = vperm.xlu0 %199, %v196
      %v201 = vpop.permute.xlu0 %200
      %vm203 = vcmask 31744
      %v205 = vsel %vm203, %v195, 0
      %vm207 = vcmask 1043456
      %v209 = vsel %vm207, %v197, 0
      %211 = vmatprep.subr.mxu0 0.0
      %212 = vmatpush1.msra.mxu0 0.0
      %213 = vmatprep.subr.mxu0 0.0
      %214 = vmatpush1.msra.mxu0 0.0
      %215 = vmatprep.subr.mxu0 0.0
      %216 = vmatpush1.msra.mxu0 0.0
      %217 = vmatprep.subr.mxu0 0.0
      %218 = vmatpush1.msra.mxu0 0.0
      %219 = vmatprep.subr.mxu0 0.0
      %220 = vmatpush1.msra.mxu0 0.0
      %221 = vmatprep.subr.mxu0 0.0
      %222 = vmatpush1.msra.mxu0 0.0
      %223 = vmatprep.subr.mxu0 0.0
      %224 = vmatpush1.msra.mxu0 0.0
      %225 = vmatprep.subr.mxu0 0.0
      %226 = vmatpush1.msra.mxu0 0.0
      %227 = vmatprep.subr.mxu0 0.0
      %228 = vmatpush1.msra.mxu0 0.0
      %229 = vmatprep.subr.mxu0 0.0
      %230 = vmatpush1.msra.mxu0 0.0
      %231 = vmatprep.subr.mxu0 0.0
      %232 = vmatpush1.msra.mxu0 0.0
      %233 = vmatprep.subr.mxu0 0.0
      %234 = vmatpush1.msra.mxu0 0.0
      %235 = vmatprep.subr.mxu0 0.0
      %236 = vmatpush1.msra.mxu0 0.0
      %237 = vmatprep.subr.mxu0 0.0
      %238 = vmatpush1.msra.mxu0 0.0
      %239 = vmatprep.subr.mxu0 0.0
      %240 = vmatpush1.msra.mxu0 0.0
      %241 = vmatprep.subr.mxu0 0.0
      %242 = vmatpush1.msra.mxu0 %v209
      %243 = vmatprep.subr.mxu0 0.0
      %244 = vmatpush2.msra.mxu0 0.0
      %245 = vmatprep.subr.mxu0 0.0
      %246 = vmatpush2.msra.mxu0 0.0
      %247 = vmatprep.subr.mxu0 0.0
      %248 = vmatpush2.msra.mxu0 0.0
      %249 = vmatprep.subr.mxu0 0.0
      %250 = vmatpush2.msra.mxu0 0.0
      %251 = vmatprep.subr.mxu0 0.0
      %252 = vmatpush2.msra.mxu0 0.0
      %253 = vmatprep.subr.mxu0 0.0
      %254 = vmatpush2.msra.mxu0 0.0
      %255 = vmatprep.subr.mxu0 0.0
      %256 = vmatpush2.msra.mxu0 0.0
      %257 = vmatprep.subr.mxu0 0.0
      %258 = vmatpush2.msra.mxu0 0.0
      %259 = vmatprep.subr.mxu0 0.0
      %260 = vmatpush2.msra.mxu0 0.0
      %261 = vmatprep.subr.mxu0 0.0
      %262 = vmatpush2.msra.mxu0 0.0
      %263 = vmatprep.subr.mxu0 0.0
      %264 = vmatpush2.msra.mxu0 0.0
      %265 = vmatprep.subr.mxu0 0.0
      %266 = vmatpush2.msra.mxu0 0.0
      %267 = vmatprep.subr.mxu0 0.0
      %268 = vmatpush2.msra.mxu0 0.0
      %269 = vmatprep.subr.mxu0 0.0
      %270 = vmatpush2.msra.mxu0 0.0
      %271 = vmatprep.subr.mxu0 0.0
      %272 = vmatpush2.msra.mxu0 0.0
      %273 = vmatprep.subr.mxu0 0.0
      %274 = vmatpush2.msra.mxu0 0.0
      %275 = vmatprep.mubr.f32.mxu0 0.0
      %276 = vmatmul.mubr.f32.gmra.mxu0 %v205
      %v277 = vpop.f32.mrf.mxu0
      %v278 = vadd.f32 %v201, %v277
      %v279 = vpop.f32.mrf.mxu0
      %280 = vdwg.mxu0
      %v281 = vmax.f32 %v278, 0.0
      %v282 = vld [vmem:[%s188] sm:$0xff]
      %vm283 = vcmask 130048
      %v284 = vsel %vm283, %v281, 0.0
      %285 = vadd.xlane.f32.xlu0 %v284
      %v286 = vpop.xlane.xlu0 %285
      %v287 = vadd.f32 %v282, %v286
      %vm288 = vcmask 7168
      %289 = vst.msk [vmem:[%s188] sm:$0xff] %vm288, %v287
      // Predicated region
      $region37: #{tpu_custom_call.1} parent=31 // pred_check
        %p290 = pneg %p189
      $region38: #{tpu_custom_call.1} parent=31 // pred_check_branch
        %292 = sbr.rel (%p290) target = $region40
      $region39: #{tpu_custom_call.1} parent=31 // pred_region
        %v293 = vld [vmem:[%s188] sm:$0xff]
        %v294 = vmul.f32 %v293, 0.0625
        %295 = vst.msk [vmem:[%s188] sm:$0xff] %vm288, %v294
      $region40: #{tpu_custom_call.1} parent=31 // pred_fallthru
        _
      %p296 = scmp.lt.s32.totalorder %s18, 1
      %s297 = scalar_select %p296, %s18, 1
      %s298 = smul.addr %s297, 8
      %s299 = scalar_lea.vmem %s3, %s298
      // Predicated region
      $region41: #{tpu_custom_call.1} parent=31 // pred_check
        %p300 = pneg %p114
      $region42: #{tpu_custom_call.1} parent=31 // pred_check_branch
        %302 = sbr.rel (%p300) target = $region44
      $region43: #{tpu_custom_call.1} parent=31 // pred_region
        _
      $region44: #{tpu_custom_call.1} parent=31 // pred_fallthru
        _
    $region32: #{tpu_custom_call.1} parent=5 // pred_fallthru
      _
    %p303 = scmp.le.s32.totalorder 2, %s9
    // Predicated region
    $region45: #{tpu_custom_call.1} parent=5 // pred_check
      %p304 = pneg %p303
    $region46: #{tpu_custom_call.1} parent=5 // pred_check_branch
      %306 = sbr.rel (%p304) target = $region48
    $region47: #{tpu_custom_call.1} parent=5 // pred_region
      %s307 = ssub.s32 %s9, 2
      // Predicated region
      $region49: #{tpu_custom_call.1} parent=47 // pred_check
        %p308 = pneg %p120
      $region50: #{tpu_custom_call.1} parent=47 // pred_check_branch
        %310 = sbr.rel (%p308) target = $region52
      $region51: #{tpu_custom_call.1} parent=47 // pred_region
        %p311 = scmp.lt.s32.totalorder %s20, 1
        %s312 = scalar_select %p311, %s20, 1
        %s313 = smul.addr %s312, 8
        %s314 = scalar_lea.vmem %s3, %s313
      $region52: #{tpu_custom_call.1} parent=47 // pred_fallthru
        _
    $region48: #{tpu_custom_call.1} parent=5 // pred_fallthru
      _
  $region6: #{tpu_custom_call.1} parent=0 // loop_footer
    %s13 = sadd.s32 1, %s9
  $region7: #{tpu_custom_call.1} parent=0 // loop_footer_branch
    %8 = sbr.rel target = $region3
  $region8: #{tpu_custom_call.1} parent=0 // loop_exit
    _

</llo_original>
